<compile_context>
chip_gen: v7x
topology: tpu7x:2x2x1
jax: 0.10.0
libtpu: 0.0.40
codegen_flags: <defaults>
</compile_context>

<pallas_src>
import math
import functools

import jax
import jax.numpy as jnp
from jax.experimental import pallas as pl
from jax.experimental.pallas import tpu as pltpu


DEFAULT_TM = 512
DEFAULT_TN = 1024
DEFAULT_TK = 512


def _round_up(v: int, m: int) -> int:
    return ((v + m - 1) // m) * m


def _sublane(dtype) -> int:
    # Native sublane packing: 8 rows for 4-byte, 16 for 2-byte, 32 for 1-byte.
    return {4: 8, 2: 16, 1: 32}.get(jnp.dtype(dtype).itemsize, 8)


def _clamp_nk_tiles(N: int, K: int, tn: int, tk: int):
    tn = min(tn, _round_up(N, 128))
    tk = min(tk, _round_up(K, 128))
    return tn, tk


def prepare_meta_linear_params(weight, bias, *, tn=DEFAULT_TN, tk=DEFAULT_TK):
    """One-time parameter prep (hoisted out of the per-call hot path).

    weight: (N, K) PyTorch nn.Linear layout.
    Returns (w_t, b2d): weight transposed to (Kp, Np) and zero-padded to tile
    multiples, bias zero-padded and reshaped to (1, Np).
    """
    N, K = weight.shape
    tn, tk = _clamp_nk_tiles(N, K, tn, tk)
    Np, Kp = _round_up(N, tn), _round_up(K, tk)
    w_t = weight.T  # (K, N) -- standard MXU contraction layout
    if (Kp, Np) != (K, N):
        w_t = jnp.pad(w_t, ((0, Kp - K), (0, Np - N)))
    b = bias if Np == N else jnp.pad(bias, (0, Np - N))
    return w_t, b.reshape(1, Np)


def _meta_linear_kernel(x_ref, w_ref, b_ref, o_ref, acc_ref, *, compute_dtype):
    # x_ref:   (tm, tk)  VMEM
    # w_ref:   (tk, tn)  VMEM  (pre-transposed weight -> plain contraction)
    # b_ref:   (1,  tn)  VMEM
    # o_ref:   (tm, tn)  VMEM
    # acc_ref: (tm, tn)  f32 VMEM scratch, resident across the K grid axis
    k = pl.program_id(2)

    @pl.when(k == 0)
    def _():
        # Seed the accumulator with the broadcast bias -> no epilogue add.
        acc_ref[...] = jnp.broadcast_to(
            b_ref[...].astype(jnp.float32), acc_ref.shape)

    a = x_ref[...]
    w = w_ref[...]
    if compute_dtype is not None:           # optional bf16 MXU path
        a = a.astype(compute_dtype)
        w = w.astype(compute_dtype)
    acc_ref[...] += jnp.dot(a, w, preferred_element_type=jnp.float32)

    @pl.when(k == pl.num_programs(2) - 1)
    def _():
        o_ref[...] = acc_ref[...].astype(o_ref.dtype)


def _vmem_limit_bytes(footprint_bytes: int) -> int:
    # Leave headroom for compiler-internal scratch; stay inside the smallest
    # per-generation VMEM (64 MiB/TC on v7x, 128 MiB on v5e/v6e).
    try:
        cap = pltpu.get_tpu_info().vmem_capacity_bytes
    except Exception:
        cap = 64 << 20
    cap = (cap * 3) // 4
    want = footprint_bytes + footprint_bytes // 2 + (2 << 20)
    return int(max(32 << 20, min(want, cap)))


@functools.partial(
    jax.jit, static_argnames=("n_out", "tm", "tn", "tk", "compute_dtype"))
def meta_linear_prepared(x, w_t, b2d, *, n_out,
                         tm=DEFAULT_TM, tn=DEFAULT_TN, tk=DEFAULT_TK,
                         compute_dtype=None):
    """Hot path: y = x @ w_t + b with pre-transposed/padded params.

    x:   (M, K)
    w_t: (Kp, Np)  from prepare_meta_linear_params
    b2d: (1, Np)
    """
    M, K = x.shape
    Kp, Np = w_t.shape
    assert K <= Kp and n_out <= Np

    # Clamp tiles for small problems (dtype-aware sublane alignment).
    sub = _sublane(x.dtype)
    tm = min(tm, _round_up(M, sub))
    tn = min(tn, Np)
    tk = min(tk, Kp)
    assert Np % tn == 0 and Kp % tk == 0, "params not padded for these tiles"

    Mp = _round_up(M, tm)

    # Skinny-batch megacore heuristic: if the M axis has one block, make sure
    # the N axis has >=2 blocks so both v7x TensorCores get work.
    if Mp // tm == 1 and Np // tn == 1 and tn % 256 == 0:
        tn //= 2

    # Only x is padded per call; extra K columns contribute 0 to the dot,
    # extra M rows / N columns are sliced off below.
    x_p = x if (Mp == M and Kp == K) else jnp.pad(x, ((0, Mp - M), (0, Kp - K)))

    grid = (Mp // tm, Np // tn, Kp // tk)
    gm, gn, _ = grid

    bytes_accessed = (Mp * Kp * x.dtype.itemsize * gn        # x re-read per j
                      + Kp * Np * w_t.dtype.itemsize * gm    # W re-read per i
                      + Np * b2d.dtype.itemsize * gm
                      + Mp * Np * x.dtype.itemsize)          # output write
    cost = pl.CostEstimate(flops=2 * Mp * Np * Kp, transcendentals=0,
                           bytes_accessed=bytes_accessed)

    footprint = (2 * tm * tk * x.dtype.itemsize       # x, double-buffered
                 + 2 * tk * tn * w_t.dtype.itemsize   # W, double-buffered
                 + 2 * tm * tn * x.dtype.itemsize     # out, double-buffered
                 + 2 * tn * b2d.dtype.itemsize        # bias
                 + tm * tn * 4)                       # f32 accumulator

    out_p = pl.pallas_call(
        functools.partial(_meta_linear_kernel, compute_dtype=compute_dtype),
        out_shape=jax.ShapeDtypeStruct((Mp, Np), x.dtype),
        grid=grid,
        in_specs=[
            pl.BlockSpec((tm, tk), lambda i, j, k: (i, k)),   # x tile
            pl.BlockSpec((tk, tn), lambda i, j, k: (k, j)),   # W^T tile
            pl.BlockSpec((1, tn), lambda i, j, k: (0, j)),    # bias tile
        ],
        out_specs=pl.BlockSpec((tm, tn), lambda i, j, k: (i, j)),
        scratch_shapes=[pltpu.VMEM((tm, tn), jnp.float32)],
        compiler_params=pltpu.CompilerParams(
            dimension_semantics=("parallel", "parallel", "arbitrary"),
            vmem_limit_bytes=_vmem_limit_bytes(footprint)),
        cost_estimate=cost,
    )(x_p, w_t, b2d)

    if Mp == M and Np == n_out:
        return out_p
    return out_p[:M, :n_out]


def meta_linear(x, weight, bias, *, tm=DEFAULT_TM, tn=DEFAULT_TN,
                tk=DEFAULT_TK, compute_dtype=None):
    """Convenience wrapper with exact F.linear semantics (y = x @ W^T + b).

    For repeated calls with the same weight, call prepare_meta_linear_params
    once and use meta_linear_prepared directly (avoids re-padding W per call).
    """
    N, _ = weight.shape
    lead = x.shape[:-1]
    x2d = x.reshape(-1, x.shape[-1]) if x.ndim != 2 else x
    w_t, b2d = prepare_meta_linear_params(weight, bias, tn=tn, tk=tk)
    y = meta_linear_prepared(x2d, w_t, b2d, n_out=N, tm=tm, tn=tn, tk=tk,
                             compute_dtype=compute_dtype)
    return y.reshape(*lead, N) if x.ndim != 2 else y


if __name__ == "__main__":
    # MetaLinear(in_features=32, out_features=64) applied to a batch of 8.
    in_features = 32
    out_features = 64
    batch = 8

    key = jax.random.PRNGKey(0)
    kx, kw, kb = jax.random.split(key, 3)

    # nn.Linear default init: U(-1/sqrt(in), 1/sqrt(in)) for weight and bias.
    bound = 1.0 / math.sqrt(in_features)
    weight = jax.random.uniform(
        kw, (out_features, in_features), jnp.float32, -bound, bound)
    bias = jax.random.uniform(
        kb, (out_features,), jnp.float32, -bound, bound)
    x = jax.random.normal(kx, (batch, in_features), jnp.float32)

    # Hoisted one-time param prep (transpose + pad), then the hot-path call.
    w_t, b2d = prepare_meta_linear_params(weight, bias)
    y = meta_linear_prepared(x, w_t, b2d, n_out=out_features)
    y = jax.block_until_ready(y)

    # Correctness check against plain-JAX reference of F.linear.
    y_ref = x @ weight.T + bias
    assert y.shape == (batch, out_features)
    assert jnp.allclose(y, y_ref, atol=1e-5, rtol=1e-5)

    # Also exercise the convenience wrapper.
    y2 = jax.block_until_ready(meta_linear(x, weight, bias))
    assert jnp.allclose(y2, y_ref, atol=1e-5, rtol=1e-5)

    print("KERNEL_OK")
</pallas_src>

<mosaic_0001>
module attributes {stable_mosaic.version = 11 : i64} {
  func.func @_meta_linear_kernel(%arg0: i32, %arg1: i32, %arg2: i32, %arg3: memref<8x128xf32, #tpu.memory_space<vmem>>, %arg4: memref<128x128xf32, #tpu.memory_space<vmem>>, %arg5: memref<1x128xf32, #tpu.memory_space<vmem>>, %arg6: memref<8x128xf32, #tpu.memory_space<vmem>>, %arg7: memref<8x128xf32, #tpu.memory_space<vmem>>) attributes {dimension_semantics = [#tpu.dimension_semantics<parallel>, #tpu.dimension_semantics<parallel>, #tpu.dimension_semantics<arbitrary>], iteration_bounds = array<i64: 1, 1, 1>, scalar_prefetch = 0 : i64, scratch_operands = 1 : i64, tpu.core_type = #tpu.core_type<tc>, window_params = [{transform_indices = @transform_0, window_bounds = array<i64: 8, 128>}, {transform_indices = @transform_1, window_bounds = array<i64: 128, 128>}, {transform_indices = @transform_2, window_bounds = array<i64: 1, 128>}, {transform_indices = @transform_3, window_bounds = array<i64: 8, 128>}]} {
    %c0_i32 = arith.constant 0 : i32
    %0 = arith.cmpi eq, %arg2, %c0_i32 : i32
    %1 = arith.extui %0 : i1 to i32
    %c0_i32_0 = arith.constant 0 : i32
    %2 = arith.cmpi ne, %1, %c0_i32_0 : i32
    scf.if %2 {
      %c0_10 = arith.constant 0 : index
      %c0_11 = arith.constant 0 : index
      %12 = vector.load %arg5[%c0_10, %c0_11] : memref<1x128xf32, #tpu.memory_space<vmem>>, vector<1x128xf32>
      %13 = vector.shape_cast %12 : vector<1x128xf32> to vector<1x128xf32>
      %14 = vector.broadcast %13 : vector<1x128xf32> to vector<8x128xf32>
      %c0_12 = arith.constant 0 : index
      %c0_13 = arith.constant 0 : index
      %15 = vector.load %arg7[%c0_12, %c0_13] : memref<8x128xf32, #tpu.memory_space<vmem>>, vector<8x128xf32>
      tpu.vector_store %arg7[%c0_12, %c0_13], %14 {strides = array<i32>} : memref<8x128xf32, #tpu.memory_space<vmem>>, vector<8x128xf32>,
    } else {
    }
    %c0 = arith.constant 0 : index
    %c0_1 = arith.constant 0 : index
    %3 = vector.load %arg3[%c0, %c0_1] : memref<8x128xf32, #tpu.memory_space<vmem>>, vector<8x128xf32>
    %c0_2 = arith.constant 0 : index
    %c0_3 = arith.constant 0 : index
    %4 = vector.load %arg4[%c0_2, %c0_3] : memref<128x128xf32, #tpu.memory_space<vmem>>, vector<128x128xf32>
    %c0_4 = arith.constant 0 : index
    %c0_5 = arith.constant 0 : index
    %5 = vector.load %arg7[%c0_4, %c0_5] : memref<8x128xf32, #tpu.memory_space<vmem>>, vector<8x128xf32>
    %cst = arith.constant dense<0.000000e+00> : vector<8x128xf32>
    %6 = tpu.matmul %3, %4, %cst {dimension_numbers = #tpu.dot_dimension_numbers<[1], [0], [0], [1], [0, 0, 1, 1], [], []>} : vector<8x128xf32>, vector<128x128xf32>, vector<8x128xf32> -> vector<8x128xf32>
    %7 = arith.addf %5, %6 : vector<8x128xf32>
    %c0_6 = arith.constant 0 : index
    %c0_7 = arith.constant 0 : index
    %8 = vector.load %arg7[%c0_6, %c0_7] : memref<8x128xf32, #tpu.memory_space<vmem>>, vector<8x128xf32>
    tpu.vector_store %arg7[%c0_6, %c0_7], %7 {strides = array<i32>} : memref<8x128xf32, #tpu.memory_space<vmem>>, vector<8x128xf32>,
    %c0_i32_8 = arith.constant 0 : i32
    %9 = arith.cmpi eq, %arg2, %c0_i32_8 : i32
    %10 = arith.extui %9 : i1 to i32
    %c0_i32_9 = arith.constant 0 : i32
    %11 = arith.cmpi ne, %10, %c0_i32_9 : i32
    scf.if %11 {
      %c0_10 = arith.constant 0 : index
      %c0_11 = arith.constant 0 : index
      %12 = vector.load %arg7[%c0_10, %c0_11] : memref<8x128xf32, #tpu.memory_space<vmem>>, vector<8x128xf32>
      %c0_12 = arith.constant 0 : index
      %c0_13 = arith.constant 0 : index
      %13 = vector.load %arg6[%c0_12, %c0_13] : memref<8x128xf32, #tpu.memory_space<vmem>>, vector<8x128xf32>
      tpu.vector_store %arg6[%c0_12, %c0_13], %12 {strides = array<i32>} : memref<8x128xf32, #tpu.memory_space<vmem>>, vector<8x128xf32>,
    } else {
    }
    return
  }
  func.func @transform_0(%arg0: i32, %arg1: i32, %arg2: i32) -> (i32, i32) {
    %c0_i32 = arith.constant 0 : i32
    return %arg0, %arg2 : i32, i32
  }
  func.func @transform_1(%arg0: i32, %arg1: i32, %arg2: i32) -> (i32, i32) {
    %c0_i32 = arith.constant 0 : i32
    return %arg2, %arg1 : i32, i32
  }
  func.func @transform_2(%arg0: i32, %arg1: i32, %arg2: i32) -> (i32, i32) {
    %c0_i32 = arith.constant 0 : i32
    %c0_i32_0 = arith.constant 0 : i32
    return %c0_i32, %arg1 : i32, i32
  }
  func.func @transform_3(%arg0: i32, %arg1: i32, %arg2: i32) -> (i32, i32) {
    %c0_i32 = arith.constant 0 : i32
    return %arg0, %arg1 : i32, i32
  }
}

</mosaic_0001>

<llo_original>
// kernel: meta_linear_prepared.1
$region0: #{meta_linear_prepared.1}
  #allocation0 [shape = 'u32[]', space=smem, size = 0x4, offset = 0x4, fixed_abs, tag = 'smem constant byte address 0x4 - core index']
  #allocation1 [shape = 'u32[144,128]{1,0:T(1,128)}', space=vmem, size = 0x12000, scoped, tag = 'internal scratch']
  #allocation2 [shape = 'f32[8,128]{1,0:T(8,128)}', space=vmem, size = 0x1000, scoped, tag = 'scratch operand']
  %s0 = inlined_call_operand.vmem [shape: f32[8,128], index: 0, kind: input, shape index: {}]
  %s1 = inlined_call_operand.hbm [shape: f32[128,128], index: 1, kind: input, shape index: {}]
  %s2 = inlined_call_operand.vmem [shape: f32[1,128], index: 2, kind: input, shape index: {}]
  %s3 = inlined_call_operand.hbm [shape: f32[8,128], index: 3, kind: output, shape index: {}]
  %s4 = sld [smem:[#allocation0]]
  $region34: #{meta_linear_prepared.1} parent=0
    _
  %s6 = ssub.s32 1, %s4
  %s7 = scalar_select 0, %s6, %s4
  $region1: #{meta_linear_prepared.1} parent=0
    #allocation3 [shape = 'u8[65536]{0}', space=vmem, size = 0x10000, scoped, tag = 'input window, operand 1, single buffered']
    #allocation4 [shape = 's32[1]{0}', space=sflag, size = 0x4, scoped, tag = 'scoped memory for meta_linear_prepared.1']
    #allocation5 [shape = 's32[1]{0}', space=sflag, size = 0x4, scoped, tag = 'scoped memory for meta_linear_prepared.1']
    #allocation6 [shape = 'u8[4096]{0}', space=vmem, size = 0x1000, scoped, tag = 'output window, operand 0, single buffered']
    %8 = vsyncpa [#allocation4], 0
    %9 = vsyncpa [#allocation5], 0
    // Predicated region
    $region2: #{meta_linear_prepared.1} parent=1 // pred_check
      _
    $region3: #{meta_linear_prepared.1} parent=1 // pred_check_branch
      %11 = sbr.rel (0) target = $region5
    $region4: #{meta_linear_prepared.1} parent=1 // pred_region
      _
    $region5: #{meta_linear_prepared.1} parent=1 // pred_fallthru
      _
    // Predicated region
    $region6: #{meta_linear_prepared.1} parent=1 // pred_check
      _
    $region7: #{meta_linear_prepared.1} parent=1 // pred_check_branch
      %13 = sbr.rel (0) target = $region9
    $region8: #{meta_linear_prepared.1} parent=1 // pred_region
      %s15 = ssub.s32 2048, 2048
      %16 = vsyncadd [#allocation4], %s15
      %s17 = sshll.u32 [#allocation3], 4
      %s18 = int_to_ptr.vmem [resolvable:$true] %s17
      %23 = dma.hbm_to_vmem [thread:$0]  %s1, 2048, %s18, [#allocation4], 128, 128, 8
    $region9: #{meta_linear_prepared.1} parent=1 // pred_fallthru
      _
    // Predicated region
    $region10: #{meta_linear_prepared.1} parent=1 // pred_check
      _
    $region11: #{meta_linear_prepared.1} parent=1 // pred_check_branch
      %25 = sbr.rel (0) target = $region13
    $region12: #{meta_linear_prepared.1} parent=1 // pred_region
      _
    $region13: #{meta_linear_prepared.1} parent=1 // pred_fallthru
      _
    // Predicated region
    $region14: #{meta_linear_prepared.1} parent=1 // pred_check
      _
    $region15: #{meta_linear_prepared.1} parent=1 // pred_check_branch
      %27 = sbr.rel (0) target = $region17
    $region16: #{meta_linear_prepared.1} parent=1 // pred_region
      %28 = dma.done [#allocation4], 2048
    $region17: #{meta_linear_prepared.1} parent=1 // pred_fallthru
      _
    %p29 = scmp.eq.s32.totalorder 0, 0
    // Predicated region
    $region18: #{meta_linear_prepared.1} parent=1 // pred_check
      %p30 = pneg %p29
    $region19: #{meta_linear_prepared.1} parent=1 // pred_check_branch
      %32 = sbr.rel (%p30) target = $region21
    $region20: #{meta_linear_prepared.1} parent=1 // pred_region
      %v33 = vld [vmem:[%s2] sm:$0x1]
      %v35 = vlaneseq
      %v36 = vshrl.u32 %v35, 7
      %v37 = vsub.s32 0, %v36
      %v38 = vrot.slane %v33, %v37
      %40 = vst [vmem:[#allocation2] sm:$0xff] %v38
    $region21: #{meta_linear_prepared.1} parent=1 // pred_fallthru
      _
    %v41 = vld [vmem:[%s0] sm:$0xff]
    %v42 = vld [vmem:[#allocation3] sm:$0xff]
    %v43 = vld [vmem:[#allocation3 + $0x8] sm:$0xff]
    %v44 = vld [vmem:[#allocation3 + $0x10] sm:$0xff]
    %v45 = vld [vmem:[#allocation3 + $0x18] sm:$0xff]
    %v46 = vld [vmem:[#allocation3 + $0x20] sm:$0xff]
    %v47 = vld [vmem:[#allocation3 + $0x28] sm:$0xff]
    %v48 = vld [vmem:[#allocation3 + $0x30] sm:$0xff]
    %v49 = vld [vmem:[#allocation3 + $0x38] sm:$0xff]
    %v50 = vld [vmem:[#allocation3 + $0x40] sm:$0xff]
    %v51 = vld [vmem:[#allocation3 + $0x48] sm:$0xff]
    %v52 = vld [vmem:[#allocation3 + $0x50] sm:$0xff]
    %v53 = vld [vmem:[#allocation3 + $0x58] sm:$0xff]
    %v54 = vld [vmem:[#allocation3 + $0x60] sm:$0xff]
    %v55 = vld [vmem:[#allocation3 + $0x68] sm:$0xff]
    %v56 = vld [vmem:[#allocation3 + $0x70] sm:$0xff]
    %v57 = vld [vmem:[#allocation3 + $0x78] sm:$0xff]
    %v58 = vld [vmem:[#allocation2] sm:$0xff]
    %59 = vmatprep.subr.mxu0 0.0
    %60 = vmatpush1.msra.mxu0 %v42
    %61 = vmatprep.subr.mxu0 0.0
    %62 = vmatpush1.msra.mxu0 %v43
    %63 = vmatprep.subr.mxu0 0.0
    %64 = vmatpush1.msra.mxu0 %v44
    %65 = vmatprep.subr.mxu0 0.0
    %66 = vmatpush1.msra.mxu0 %v45
    %67 = vmatprep.subr.mxu0 0.0
    %68 = vmatpush1.msra.mxu0 %v46
    %69 = vmatprep.subr.mxu0 0.0
    %70 = vmatpush1.msra.mxu0 %v47
    %71 = vmatprep.subr.mxu0 0.0
    %72 = vmatpush1.msra.mxu0 %v48
    %73 = vmatprep.subr.mxu0 0.0
    %74 = vmatpush1.msra.mxu0 %v49
    %75 = vmatprep.subr.mxu0 0.0
    %76 = vmatpush1.msra.mxu0 %v50
    %77 = vmatprep.subr.mxu0 0.0
    %78 = vmatpush1.msra.mxu0 %v51
    %79 = vmatprep.subr.mxu0 0.0
    %80 = vmatpush1.msra.mxu0 %v52
    %81 = vmatprep.subr.mxu0 0.0
    %82 = vmatpush1.msra.mxu0 %v53
    %83 = vmatprep.subr.mxu0 0.0
    %84 = vmatpush1.msra.mxu0 %v54
    %85 = vmatprep.subr.mxu0 0.0
    %86 = vmatpush1.msra.mxu0 %v55
    %87 = vmatprep.subr.mxu0 0.0
    %88 = vmatpush1.msra.mxu0 %v56
    %89 = vmatprep.subr.mxu0 0.0
    %90 = vmatpush1.msra.mxu0 %v57
    %91 = vmatprep.subr.mxu0 0.0
    %92 = vmatpush1.msra.mxu0 0.0
    %93 = vmatprep.subr.mxu0 0.0
    %94 = vmatpush1.msra.mxu0 0.0
    %95 = vmatprep.subr.mxu0 0.0
    %96 = vmatpush1.msra.mxu0 0.0
    %97 = vmatprep.subr.mxu0 0.0
    %98 = vmatpush1.msra.mxu0 0.0
    %99 = vmatprep.subr.mxu0 0.0
    %100 = vmatpush1.msra.mxu0 0.0
    %101 = vmatprep.subr.mxu0 0.0
    %102 = vmatpush1.msra.mxu0 0.0
    %103 = vmatprep.subr.mxu0 0.0
    %104 = vmatpush1.msra.mxu0 0.0
    %105 = vmatprep.subr.mxu0 0.0
    %106 = vmatpush1.msra.mxu0 0.0
    %107 = vmatprep.subr.mxu0 0.0
    %108 = vmatpush1.msra.mxu0 0.0
    %109 = vmatprep.subr.mxu0 0.0
    %110 = vmatpush1.msra.mxu0 0.0
    %111 = vmatprep.subr.mxu0 0.0
    %112 = vmatpush1.msra.mxu0 0.0
    %113 = vmatprep.subr.mxu0 0.0
    %114 = vmatpush1.msra.mxu0 0.0
    %115 = vmatprep.subr.mxu0 0.0
    %116 = vmatpush1.msra.mxu0 0.0
    %117 = vmatprep.subr.mxu0 0.0
    %118 = vmatpush1.msra.mxu0 0.0
    %119 = vmatprep.subr.mxu0 0.0
    %120 = vmatpush1.msra.mxu0 0.0
    %121 = vmatprep.subr.mxu0 0.0
    %122 = vmatpush1.msra.mxu0 0.0
    %123 = vmatprep.mubr.f32.mxu0 0.0
    %124 = vmatmul.mubr.f32.gmra.mrb[0].mxu0 %v41
    %v125 = vpop.f32.mrb[0].mxu0
    %v126 = vadd.f32 0.0, %v125
    %v127 = vpop.f32.mrb[0].mxu0
    %128 = vdwg.mxu0
    %v129 = vadd.f32 %v58, %v126
    %130 = vst [vmem:[#allocation2] sm:$0xff] %v129
    // Predicated region
    $region22: #{meta_linear_prepared.1} parent=1 // pred_check
      %p131 = pneg %p29
    $region23: #{meta_linear_prepared.1} parent=1 // pred_check_branch
      %133 = sbr.rel (%p131) target = $region25
    $region24: #{meta_linear_prepared.1} parent=1 // pred_region
      %v134 = vld [vmem:[#allocation2] sm:$0xff]
      %135 = vst [vmem:[#allocation6] sm:$0xff] %v134
    $region25: #{meta_linear_prepared.1} parent=1 // pred_fallthru
      _
    // Predicated region
    $region26: #{meta_linear_prepared.1} parent=1 // pred_check
      _
    $region27: #{meta_linear_prepared.1} parent=1 // pred_check_branch
      %137 = sbr.rel (0) target = $region29
    $region28: #{meta_linear_prepared.1} parent=1 // pred_region
      %s139 = ssub.s32 128, 128
      %140 = vsyncadd [#allocation5], %s139
      %s142 = sshll.u32 [#allocation6], 4
      %s143 = int_to_ptr.vmem [resolvable:$true] %s142
      %145 = dma.vmem_to_hbm [thread:$0]  %s143, 128, %s3, [#allocation5]
    $region29: #{meta_linear_prepared.1} parent=1 // pred_fallthru
      _
    // Predicated region
    $region30: #{meta_linear_prepared.1} parent=1 // pred_check
      _
    $region31: #{meta_linear_prepared.1} parent=1 // pred_check_branch
      %147 = sbr.rel (0) target = $region33
    $region32: #{meta_linear_prepared.1} parent=1 // pred_region
      %148 = dma.done [#allocation5], 128
    $region33: #{meta_linear_prepared.1} parent=1 // pred_fallthru
      _
    %149 = vsyncpa [#allocation4], 1
    %150 = vsyncpa [#allocation5], 1

</llo_original>
